<compile_context>
chip_gen: v6e
topology: v6e:2x2x1
jax: 0.10.0
libtpu: 0.0.40
codegen_flags: <defaults>
</compile_context>

<pallas_src>
import jax
import jax.numpy as jnp
from jax import lax
from jax.experimental import pallas as pl
from jax.experimental.pallas import tpu as pltpu


def _round_up(x, m):
    return ((x + m - 1) // m) * m


def prepare_classifier_params(weight, bias, compute_dtype=None):
    """One-time parameter prep, hoisted out of the forward path.

    weight: [C, F] (PyTorch nn.Linear layout) -> stored as [F, C] so the kernel contracts
    dims (1, 0) directly on the MXU (no in-kernel transpose).  Optional one-time bf16 cast.
    """
    w_t = jnp.asarray(weight).T                      # [F, C]
    if compute_dtype is not None:
        w_t = w_t.astype(compute_dtype)
    b_row = jnp.asarray(bias).reshape(1, -1).astype(jnp.float32)
    return w_t, b_row


def _linear_kernel(x_ref, w_ref, b_ref, o_ref):
    """x: [tb, F], w: [F, C], b: [1, C] -> o: [tb, C]; f32 accumulation on the MXU."""
    acc = jnp.dot(x_ref[...], w_ref[...], preferred_element_type=jnp.float32)
    o_ref[...] = (acc + b_ref[...]).astype(o_ref.dtype)


def _linear_kernel_ktiled(x_ref, w_ref, b_ref, o_ref, acc_ref):
    """Fallback for very large F: K-tiled reduction with an f32 VMEM accumulator."""
    k = pl.program_id(1)

    @pl.when(k == 0)
    def _():
        acc_ref[...] = jnp.zeros_like(acc_ref)

    acc_ref[...] += jnp.dot(x_ref[...], w_ref[...],
                            preferred_element_type=jnp.float32)

    @pl.when(k == pl.num_programs(1) - 1)
    def _():
        o_ref[...] = (acc_ref[...] + b_ref[...]).astype(o_ref.dtype)


def _pick_batch_tile(Bp, tb):
    """Largest multiple-of-8 divisor of Bp (Bp % 8 == 0) that is <= tb."""
    if Bp <= tb:
        return Bp
    best = 8
    t = 8
    while t <= tb:
        if Bp % t == 0:
            best = t
        t += 8
    return best


def classifier_forward(x, w_t, b_row, *, tb=128, tk=2048, max_untiled_f=16384,
                       compute_dtype=None):
    """x: [B, F]; w_t: [F, C] (pre-transposed / pre-cast); b_row: [1, C] f32. Returns [B, C]."""
    B, F = x.shape
    Fw, C = w_t.shape
    assert Fw == F and b_row.shape == (1, C)
    out_dtype = x.dtype

    if compute_dtype is not None:
        x = x.astype(compute_dtype)

    x_item = jnp.dtype(x.dtype).itemsize
    w_item = jnp.dtype(w_t.dtype).itemsize
    o_item = jnp.dtype(out_dtype).itemsize

    # Batch: pad only to a sublane multiple (8); pick a tile that divides Bp exactly.
    Bp = _round_up(B, 8)
    tb_eff = _pick_batch_tile(Bp, tb)
    xp = x if Bp == B else jnp.pad(x, ((0, Bp - B), (0, 0)))
    nb = Bp // tb_eff

    cost = pl.CostEstimate(
        flops=2 * B * C * F,
        transcendentals=0,
        bytes_accessed=B * F * x_item + F * C * w_item + B * C * o_item + C * 4,
    )

    if F <= max_untiled_f:
        # Single-shot K: full [F, C] weight block (tiny for this classifier), no scratch,
        # no per-K grid overhead.  Output tile is (tb, C=20): masked vst on a few KB is free.
        out_p = pl.pallas_call(
            _linear_kernel,
            out_shape=jax.ShapeDtypeStruct((Bp, C), out_dtype),
            grid_spec=pltpu.PrefetchScalarGridSpec(
                num_scalar_prefetch=0,
                grid=(nb,),
                in_specs=[
                    pl.BlockSpec((tb_eff, F), lambda i: (i, 0)),   # x tile
                    pl.BlockSpec((F, C), lambda i: (0, 0)),        # full weight, no C pad
                    pl.BlockSpec((1, C), lambda i: (0, 0)),        # bias
                ],
                out_specs=pl.BlockSpec((tb_eff, C), lambda i: (i, 0)),
            ),
            compiler_params=pltpu.CompilerParams(
                dimension_semantics=("parallel",)),
            cost_estimate=cost,
        )(xp, w_t, b_row)
    else:
        # Very-large-F fallback: K-tiled reduction (axis last), f32 accumulator, explicit
        # VMEM budget for v7x's smaller scoped VMEM.
        # TODO(synk): for the huge-F path the F padding of the weight should also be hoisted.
        Fp = _round_up(F, tk)
        xpf = xp if Fp == F else jnp.pad(xp, ((0, 0), (0, Fp - F)))
        wpf = w_t if Fp == F else jnp.pad(w_t, ((0, Fp - F), (0, 0)))
        nk = Fp // tk
        out_p = pl.pallas_call(
            _linear_kernel_ktiled,
            out_shape=jax.ShapeDtypeStruct((Bp, C), out_dtype),
            grid_spec=pltpu.PrefetchScalarGridSpec(
                num_scalar_prefetch=0,
                grid=(nb, nk),
                in_specs=[
                    pl.BlockSpec((tb_eff, tk), lambda i, k: (i, k)),
                    pl.BlockSpec((tk, C), lambda i, k: (k, 0)),
                    pl.BlockSpec((1, C), lambda i, k: (0, 0)),
                ],
                out_specs=pl.BlockSpec((tb_eff, C), lambda i, k: (i, 0)),
                scratch_shapes=[pltpu.VMEM((tb_eff, C), jnp.float32)],
            ),
            compiler_params=pltpu.CompilerParams(
                dimension_semantics=("parallel", "arbitrary"),
                vmem_limit_bytes=32 << 20),
            cost_estimate=cost,
        )(xpf, wpf, b_row)

    return out_p if Bp == B else out_p[:B]


if __name__ == "__main__":
    # Shapes consistent with the module defaults: Linear(2048 -> 20), small batch.
    B, in_features, num_class = 4, 2048, 20

    key = jax.random.PRNGKey(0)
    kx, kw, kb = jax.random.split(key, 3)

    # Deterministic parameter init (PyTorch nn.Linear-style uniform bound).
    bound = 1.0 / jnp.sqrt(jnp.float32(in_features))
    weight = jax.random.uniform(kw, (num_class, in_features), jnp.float32,
                                minval=-bound, maxval=bound)
    bias = jax.random.uniform(kb, (num_class,), jnp.float32,
                              minval=-bound, maxval=bound)
    x = jax.random.normal(kx, (B, in_features), jnp.float32)

    # Reference (PyTorch forward applies fc1 only; self.relu is unused in forward).
    ref = jnp.dot(x, weight.T, precision=lax.Precision.HIGHEST) + bias

    # One-time parameter prep (hoisted out of the forward path).
    w_t_f32, b_row = prepare_classifier_params(weight, bias)
    w_t_bf16, _ = prepare_classifier_params(weight, bias, compute_dtype=jnp.bfloat16)

    # f32 path (single-shot K, no padding of C or F).
    out = jax.block_until_ready(classifier_forward(x, w_t_f32, b_row))
    assert out.shape == (B, num_class)
    assert jnp.allclose(out, ref, atol=2e-4, rtol=1e-4)

    # bf16 compute path (recommended default on v6e/v7x), f32 accumulation in-kernel.
    out_bf16 = jax.block_until_ready(
        classifier_forward(x, w_t_bf16, b_row, compute_dtype=jnp.bfloat16))
    assert out_bf16.shape == (B, num_class)
    assert jnp.allclose(out_bf16, ref, atol=3e-2, rtol=3e-2)

    # Exercise the very-large-F fallback path (forced here for correctness coverage).
    out_kt = jax.block_until_ready(
        classifier_forward(x, w_t_f32, b_row, tk=1024, max_untiled_f=1024))
    assert out_kt.shape == (B, num_class)
    assert jnp.allclose(out_kt, ref, atol=2e-4, rtol=1e-4)

    print("KERNEL_OK")
</pallas_src>

<mosaic_0001>
module attributes {stable_mosaic.version = 11 : i64} {
  func.func @_linear_kernel(%arg0: i32, %arg1: memref<8x2048xf32, #tpu.memory_space<vmem>>, %arg2: memref<2048x20xf32, #tpu.memory_space<vmem>>, %arg3: memref<1x20xf32, #tpu.memory_space<vmem>>, %arg4: memref<8x20xf32, #tpu.memory_space<vmem>>) attributes {dimension_semantics = [#tpu.dimension_semantics<parallel>], iteration_bounds = array<i64: 1>, scalar_prefetch = 0 : i64, scratch_operands = 0 : i64, tpu.core_type = #tpu.core_type<tc>, window_params = [{transform_indices = @transform_0, window_bounds = array<i64: 8, 2048>}, {pipeline_mode = #tpu.pipeline_mode<synchronous>, transform_indices = @transform_1, window_bounds = array<i64: 2048, 20>}, {pipeline_mode = #tpu.pipeline_mode<synchronous>, transform_indices = @transform_2, window_bounds = array<i64: 1, 20>}, {transform_indices = @transform_3, window_bounds = array<i64: 8, 20>}]} {
    %c0 = arith.constant 0 : index
    %c0_0 = arith.constant 0 : index
    %0 = vector.load %arg1[%c0, %c0_0] : memref<8x2048xf32, #tpu.memory_space<vmem>>, vector<8x2048xf32>
    %c0_1 = arith.constant 0 : index
    %c0_2 = arith.constant 0 : index
    %1 = vector.load %arg2[%c0_1, %c0_2] : memref<2048x20xf32, #tpu.memory_space<vmem>>, vector<2048x20xf32>
    %cst = arith.constant dense<0.000000e+00> : vector<8x20xf32>
    %2 = tpu.matmul %0, %1, %cst {dimension_numbers = #tpu.dot_dimension_numbers<[1], [0], [0], [1], [0, 0, 1, 1], [], []>} : vector<8x2048xf32>, vector<2048x20xf32>, vector<8x20xf32> -> vector<8x20xf32>
    %c0_3 = arith.constant 0 : index
    %c0_4 = arith.constant 0 : index
    %3 = vector.load %arg3[%c0_3, %c0_4] : memref<1x20xf32, #tpu.memory_space<vmem>>, vector<1x20xf32>
    %4 = vector.broadcast %3 : vector<1x20xf32> to vector<8x20xf32>
    %5 = arith.addf %2, %4 : vector<8x20xf32>
    %c0_5 = arith.constant 0 : index
    %c0_6 = arith.constant 0 : index
    %6 = vector.load %arg4[%c0_5, %c0_6] : memref<8x20xf32, #tpu.memory_space<vmem>>, vector<8x20xf32>
    tpu.vector_store %arg4[%c0_5, %c0_6], %5 {strides = array<i32>} : memref<8x20xf32, #tpu.memory_space<vmem>>, vector<8x20xf32>,
    return
  }
  func.func @transform_0(%arg0: i32) -> (i32, i32) {
    %c0_i32 = arith.constant 0 : i32
    %c0_i32_0 = arith.constant 0 : i32
    return %arg0, %c0_i32 : i32, i32
  }
  func.func @transform_1(%arg0: i32) -> (i32, i32) {
    %c0_i32 = arith.constant 0 : i32
    %c0_i32_0 = arith.constant 0 : i32
    %c0_i32_1 = arith.constant 0 : i32
    return %c0_i32, %c0_i32_0 : i32, i32
  }
  func.func @transform_2(%arg0: i32) -> (i32, i32) {
    %c0_i32 = arith.constant 0 : i32
    %c0_i32_0 = arith.constant 0 : i32
    %c0_i32_1 = arith.constant 0 : i32
    return %c0_i32, %c0_i32_0 : i32, i32
  }
  func.func @transform_3(%arg0: i32) -> (i32, i32) {
    %c0_i32 = arith.constant 0 : i32
    %c0_i32_0 = arith.constant 0 : i32
    return %arg0, %c0_i32 : i32, i32
  }
}

</mosaic_0001>

<llo_original>
// kernel: tpu_custom_call.1
$region0: #{tpu_custom_call.1}
  #allocation0 [shape = 'u32[]', space=smem, size = 0x4, offset = 0x4, fixed_abs, tag = 'smem constant byte address 0x4 - core index']
  #allocation1 [shape = 'u32[144,128]{1,0:T(1,128)}', space=vmem, size = 0x12000, scoped, tag = 'internal scratch']
  %s0 = inlined_call_operand.vmem [shape: f32[8,2048], index: 0, kind: input, shape index: {}]
  %s1 = inlined_call_operand.vmem [shape: f32[2048,20], index: 1, kind: input, shape index: {}]
  %s2 = inlined_call_operand.vmem [shape: f32[1,20], index: 2, kind: input, shape index: {}]
  %s3 = inlined_call_operand.hbm [shape: f32[8,20], index: 3, kind: output, shape index: {}]
  %s4 = sld [smem:[#allocation0]]
  $region22: #{tpu_custom_call.1} parent=0
    _
  %s6 = ssub.s32 1, %s4
  %s7 = scalar_select 0, %s6, %s4
  $region1: #{tpu_custom_call.1} parent=0
    #allocation2 [shape = 'u8[4096]{0}', space=vmem, size = 0x1000, scoped, tag = 'output window, operand 0, single buffered']
    #allocation3 [shape = 's32[1]{0}', space=sflag, size = 0x4, scoped, tag = 'scoped memory for tpu_custom_call.1']
    %8 = vsyncpa [#allocation3], 0
    // Predicated region
    $region2: #{tpu_custom_call.1} parent=1 // pred_check
      _
    $region3: #{tpu_custom_call.1} parent=1 // pred_check_branch
      %10 = sbr.rel (0) target = $region5
    $region4: #{tpu_custom_call.1} parent=1 // pred_region
      _
    $region5: #{tpu_custom_call.1} parent=1 // pred_fallthru
      _
    // Predicated region
    $region6: #{tpu_custom_call.1} parent=1 // pred_check
      _
    $region7: #{tpu_custom_call.1} parent=1 // pred_check_branch
      %12 = sbr.rel (0) target = $region9
    $region8: #{tpu_custom_call.1} parent=1 // pred_region
      _
    $region9: #{tpu_custom_call.1} parent=1 // pred_fallthru
      _
    // Predicated region
    $region10: #{tpu_custom_call.1} parent=1 // pred_check
      _
    $region11: #{tpu_custom_call.1} parent=1 // pred_check_branch
      %14 = sbr.rel (0) target = $region13
    $region12: #{tpu_custom_call.1} parent=1 // pred_region
      _
    $region13: #{tpu_custom_call.1} parent=1 // pred_fallthru
      _
    %v15 = vld [vmem:[%s0] sm:$0xff]
    %v16 = vld [vmem:[%s0 + $0x8] sm:$0xff]
    %v17 = vld [vmem:[%s0 + $0x10] sm:$0xff]
    %v18 = vld [vmem:[%s0 + $0x18] sm:$0xff]
    %v19 = vld [vmem:[%s0 + $0x20] sm:$0xff]
    %v20 = vld [vmem:[%s0 + $0x28] sm:$0xff]
    %v21 = vld [vmem:[%s0 + $0x30] sm:$0xff]
    %v22 = vld [vmem:[%s0 + $0x38] sm:$0xff]
    %v23 = vld [vmem:[%s0 + $0x40] sm:$0xff]
    %v24 = vld [vmem:[%s0 + $0x48] sm:$0xff]
    %v25 = vld [vmem:[%s0 + $0x50] sm:$0xff]
    %v26 = vld [vmem:[%s0 + $0x58] sm:$0xff]
    %v27 = vld [vmem:[%s0 + $0x60] sm:$0xff]
    %v28 = vld [vmem:[%s0 + $0x68] sm:$0xff]
    %v29 = vld [vmem:[%s0 + $0x70] sm:$0xff]
    %v30 = vld [vmem:[%s0 + $0x78] sm:$0xff]
    %v31 = vld [vmem:[%s1] sm:$0xff]
    %v32 = vld [vmem:[%s1 + $0x8] sm:$0xff]
    %v33 = vld [vmem:[%s1 + $0x10] sm:$0xff]
    %v34 = vld [vmem:[%s1 + $0x18] sm:$0xff]
    %v35 = vld [vmem:[%s1 + $0x20] sm:$0xff]
    %v36 = vld [vmem:[%s1 + $0x28] sm:$0xff]
    %v37 = vld [vmem:[%s1 + $0x30] sm:$0xff]
    %v38 = vld [vmem:[%s1 + $0x38] sm:$0xff]
    %v39 = vld [vmem:[%s1 + $0x40] sm:$0xff]
    %v40 = vld [vmem:[%s1 + $0x48] sm:$0xff]
    %v41 = vld [vmem:[%s1 + $0x50] sm:$0xff]
    %v42 = vld [vmem:[%s1 + $0x58] sm:$0xff]
    %v43 = vld [vmem:[%s1 + $0x60] sm:$0xff]
    %v44 = vld [vmem:[%s1 + $0x68] sm:$0xff]
    %v45 = vld [vmem:[%s1 + $0x70] sm:$0xff]
    %v46 = vld [vmem:[%s1 + $0x78] sm:$0xff]
    %v47 = vld [vmem:[%s1 + $0x80] sm:$0xff]
    %v48 = vld [vmem:[%s1 + $0x88] sm:$0xff]
    %v49 = vld [vmem:[%s1 + $0x90] sm:$0xff]
    %v50 = vld [vmem:[%s1 + $0x98] sm:$0xff]
    %v51 = vld [vmem:[%s1 + $0xa0] sm:$0xff]
    %v52 = vld [vmem:[%s1 + $0xa8] sm:$0xff]
    %v53 = vld [vmem:[%s1 + $0xb0] sm:$0xff]
    %v54 = vld [vmem:[%s1 + $0xb8] sm:$0xff]
    %v55 = vld [vmem:[%s1 + $0xc0] sm:$0xff]
    %v56 = vld [vmem:[%s1 + $0xc8] sm:$0xff]
    %v57 = vld [vmem:[%s1 + $0xd0] sm:$0xff]
    %v58 = vld [vmem:[%s1 + $0xd8] sm:$0xff]
    %v59 = vld [vmem:[%s1 + $0xe0] sm:$0xff]
    %v60 = vld [vmem:[%s1 + $0xe8] sm:$0xff]
    %v61 = vld [vmem:[%s1 + $0xf0] sm:$0xff]
    %v62 = vld [vmem:[%s1 + $0xf8] sm:$0xff]
    %v63 = vld [vmem:[%s1 + $0x100] sm:$0xff]
    %v64 = vld [vmem:[%s1 + $0x108] sm:$0xff]
    %v65 = vld [vmem:[%s1 + $0x110] sm:$0xff]
    %v66 = vld [vmem:[%s1 + $0x118] sm:$0xff]
    %v67 = vld [vmem:[%s1 + $0x120] sm:$0xff]
    %v68 = vld [vmem:[%s1 + $0x128] sm:$0xff]
    %v69 = vld [vmem:[%s1 + $0x130] sm:$0xff]
    %v70 = vld [vmem:[%s1 + $0x138] sm:$0xff]
    %v71 = vld [vmem:[%s1 + $0x140] sm:$0xff]
    %v72 = vld [vmem:[%s1 + $0x148] sm:$0xff]
    %v73 = vld [vmem:[%s1 + $0x150] sm:$0xff]
    %v74 = vld [vmem:[%s1 + $0x158] sm:$0xff]
    %v75 = vld [vmem:[%s1 + $0x160] sm:$0xff]
    %v76 = vld [vmem:[%s1 + $0x168] sm:$0xff]
    %v77 = vld [vmem:[%s1 + $0x170] sm:$0xff]
    %v78 = vld [vmem:[%s1 + $0x178] sm:$0xff]
    %v79 = vld [vmem:[%s1 + $0x180] sm:$0xff]
    %v80 = vld [vmem:[%s1 + $0x188] sm:$0xff]
    %v81 = vld [vmem:[%s1 + $0x190] sm:$0xff]
    %v82 = vld [vmem:[%s1 + $0x198] sm:$0xff]
    %v83 = vld [vmem:[%s1 + $0x1a0] sm:$0xff]
    %v84 = vld [vmem:[%s1 + $0x1a8] sm:$0xff]
    %v85 = vld [vmem:[%s1 + $0x1b0] sm:$0xff]
    %v86 = vld [vmem:[%s1 + $0x1b8] sm:$0xff]
    %v87 = vld [vmem:[%s1 + $0x1c0] sm:$0xff]
    %v88 = vld [vmem:[%s1 + $0x1c8] sm:$0xff]
    %v89 = vld [vmem:[%s1 + $0x1d0] sm:$0xff]
    %v90 = vld [vmem:[%s1 + $0x1d8] sm:$0xff]
    %v91 = vld [vmem:[%s1 + $0x1e0] sm:$0xff]
    %v92 = vld [vmem:[%s1 + $0x1e8] sm:$0xff]
    %v93 = vld [vmem:[%s1 + $0x1f0] sm:$0xff]
    %v94 = vld [vmem:[%s1 + $0x1f8] sm:$0xff]
    %v95 = vld [vmem:[%s1 + $0x200] sm:$0xff]
    %v96 = vld [vmem:[%s1 + $0x208] sm:$0xff]
    %v97 = vld [vmem:[%s1 + $0x210] sm:$0xff]
    %v98 = vld [vmem:[%s1 + $0x218] sm:$0xff]
    %v99 = vld [vmem:[%s1 + $0x220] sm:$0xff]
    %v100 = vld [vmem:[%s1 + $0x228] sm:$0xff]
    %v101 = vld [vmem:[%s1 + $0x230] sm:$0xff]
    %v102 = vld [vmem:[%s1 + $0x238] sm:$0xff]
    %v103 = vld [vmem:[%s1 + $0x240] sm:$0xff]
    %v104 = vld [vmem:[%s1 + $0x248] sm:$0xff]
    %v105 = vld [vmem:[%s1 + $0x250] sm:$0xff]
    %v106 = vld [vmem:[%s1 + $0x258] sm:$0xff]
    %v107 = vld [vmem:[%s1 + $0x260] sm:$0xff]
    %v108 = vld [vmem:[%s1 + $0x268] sm:$0xff]
    %v109 = vld [vmem:[%s1 + $0x270] sm:$0xff]
    %v110 = vld [vmem:[%s1 + $0x278] sm:$0xff]
    %v111 = vld [vmem:[%s1 + $0x280] sm:$0xff]
    %v112 = vld [vmem:[%s1 + $0x288] sm:$0xff]
    %v113 = vld [vmem:[%s1 + $0x290] sm:$0xff]
    %v114 = vld [vmem:[%s1 + $0x298] sm:$0xff]
    %v115 = vld [vmem:[%s1 + $0x2a0] sm:$0xff]
    %v116 = vld [vmem:[%s1 + $0x2a8] sm:$0xff]
    %v117 = vld [vmem:[%s1 + $0x2b0] sm:$0xff]
    %v118 = vld [vmem:[%s1 + $0x2b8] sm:$0xff]
    %v119 = vld [vmem:[%s1 + $0x2c0] sm:$0xff]
    %v120 = vld [vmem:[%s1 + $0x2c8] sm:$0xff]
    %v121 = vld [vmem:[%s1 + $0x2d0] sm:$0xff]
    %v122 = vld [vmem:[%s1 + $0x2d8] sm:$0xff]
    %v123 = vld [vmem:[%s1 + $0x2e0] sm:$0xff]
    %v124 = vld [vmem:[%s1 + $0x2e8] sm:$0xff]
    %v125 = vld [vmem:[%s1 + $0x2f0] sm:$0xff]
    %v126 = vld [vmem:[%s1 + $0x2f8] sm:$0xff]
    %v127 = vld [vmem:[%s1 + $0x300] sm:$0xff]
    %v128 = vld [vmem:[%s1 + $0x308] sm:$0xff]
    %v129 = vld [vmem:[%s1 + $0x310] sm:$0xff]
    %v130 = vld [vmem:[%s1 + $0x318] sm:$0xff]
    %v131 = vld [vmem:[%s1 + $0x320] sm:$0xff]
    %v132 = vld [vmem:[%s1 + $0x328] sm:$0xff]
    %v133 = vld [vmem:[%s1 + $0x330] sm:$0xff]
    %v134 = vld [vmem:[%s1 + $0x338] sm:$0xff]
    %v135 = vld [vmem:[%s1 + $0x340] sm:$0xff]
    %v136 = vld [vmem:[%s1 + $0x348] sm:$0xff]
    %v137 = vld [vmem:[%s1 + $0x350] sm:$0xff]
    %v138 = vld [vmem:[%s1 + $0x358] sm:$0xff]
    %v139 = vld [vmem:[%s1 + $0x360] sm:$0xff]
    %v140 = vld [vmem:[%s1 + $0x368] sm:$0xff]
    %v141 = vld [vmem:[%s1 + $0x370] sm:$0xff]
    %v142 = vld [vmem:[%s1 + $0x378] sm:$0xff]
    %v143 = vld [vmem:[%s1 + $0x380] sm:$0xff]
    %v144 = vld [vmem:[%s1 + $0x388] sm:$0xff]
    %v145 = vld [vmem:[%s1 + $0x390] sm:$0xff]
    %v146 = vld [vmem:[%s1 + $0x398] sm:$0xff]
    %v147 = vld [vmem:[%s1 + $0x3a0] sm:$0xff]
    %v148 = vld [vmem:[%s1 + $0x3a8] sm:$0xff]
    %v149 = vld [vmem:[%s1 + $0x3b0] sm:$0xff]
    %v150 = vld [vmem:[%s1 + $0x3b8] sm:$0xff]
    %v151 = vld [vmem:[%s1 + $0x3c0] sm:$0xff]
    %v152 = vld [vmem:[%s1 + $0x3c8] sm:$0xff]
    %v153 = vld [vmem:[%s1 + $0x3d0] sm:$0xff]
    %v154 = vld [vmem:[%s1 + $0x3d8] sm:$0xff]
    %v155 = vld [vmem:[%s1 + $0x3e0] sm:$0xff]
    %v156 = vld [vmem:[%s1 + $0x3e8] sm:$0xff]
    %v157 = vld [vmem:[%s1 + $0x3f0] sm:$0xff]
    %v158 = vld [vmem:[%s1 + $0x3f8] sm:$0xff]
    %v159 = vld [vmem:[%s1 + $0x400] sm:$0xff]
    %v160 = vld [vmem:[%s1 + $0x408] sm:$0xff]
    %v161 = vld [vmem:[%s1 + $0x410] sm:$0xff]
    %v162 = vld [vmem:[%s1 + $0x418] sm:$0xff]
    %v163 = vld [vmem:[%s1 + $0x420] sm:$0xff]
    %v164 = vld [vmem:[%s1 + $0x428] sm:$0xff]
    %v165 = vld [vmem:[%s1 + $0x430] sm:$0xff]
    %v166 = vld [vmem:[%s1 + $0x438] sm:$0xff]
    %v167 = vld [vmem:[%s1 + $0x440] sm:$0xff]
    %v168 = vld [vmem:[%s1 + $0x448] sm:$0xff]
    %v169 = vld [vmem:[%s1 + $0x450] sm:$0xff]
    %v170 = vld [vmem:[%s1 + $0x458] sm:$0xff]
    %v171 = vld [vmem:[%s1 + $0x460] sm:$0xff]
    %v172 = vld [vmem:[%s1 + $0x468] sm:$0xff]
    %v173 = vld [vmem:[%s1 + $0x470] sm:$0xff]
    %v174 = vld [vmem:[%s1 + $0x478] sm:$0xff]
    %v175 = vld [vmem:[%s1 + $0x480] sm:$0xff]
    %v176 = vld [vmem:[%s1 + $0x488] sm:$0xff]
    %v177 = vld [vmem:[%s1 + $0x490] sm:$0xff]
    %v178 = vld [vmem:[%s1 + $0x498] sm:$0xff]
    %v179 = vld [vmem:[%s1 + $0x4a0] sm:$0xff]
    %v180 = vld [vmem:[%s1 + $0x4a8] sm:$0xff]
    %v181 = vld [vmem:[%s1 + $0x4b0] sm:$0xff]
    %v182 = vld [vmem:[%s1 + $0x4b8] sm:$0xff]
    %v183 = vld [vmem:[%s1 + $0x4c0] sm:$0xff]
    %v184 = vld [vmem:[%s1 + $0x4c8] sm:$0xff]
    %v185 = vld [vmem:[%s1 + $0x4d0] sm:$0xff]
    %v186 = vld [vmem:[%s1 + $0x4d8] sm:$0xff]
    %v187 = vld [vmem:[%s1 + $0x4e0] sm:$0xff]
    %v188 = vld [vmem:[%s1 + $0x4e8] sm:$0xff]
    %v189 = vld [vmem:[%s1 + $0x4f0] sm:$0xff]
    %v190 = vld [vmem:[%s1 + $0x4f8] sm:$0xff]
    %v191 = vld [vmem:[%s1 + $0x500] sm:$0xff]
    %v192 = vld [vmem:[%s1 + $0x508] sm:$0xff]
    %v193 = vld [vmem:[%s1 + $0x510] sm:$0xff]
    %v194 = vld [vmem:[%s1 + $0x518] sm:$0xff]
    %v195 = vld [vmem:[%s1 + $0x520] sm:$0xff]
    %v196 = vld [vmem:[%s1 + $0x528] sm:$0xff]
    %v197 = vld [vmem:[%s1 + $0x530] sm:$0xff]
    %v198 = vld [vmem:[%s1 + $0x538] sm:$0xff]
    %v199 = vld [vmem:[%s1 + $0x540] sm:$0xff]
    %v200 = vld [vmem:[%s1 + $0x548] sm:$0xff]
    %v201 = vld [vmem:[%s1 + $0x550] sm:$0xff]
    %v202 = vld [vmem:[%s1 + $0x558] sm:$0xff]
    %v203 = vld [vmem:[%s1 + $0x560] sm:$0xff]
    %v204 = vld [vmem:[%s1 + $0x568] sm:$0xff]
    %v205 = vld [vmem:[%s1 + $0x570] sm:$0xff]
    %v206 = vld [vmem:[%s1 + $0x578] sm:$0xff]
    %v207 = vld [vmem:[%s1 + $0x580] sm:$0xff]
    %v208 = vld [vmem:[%s1 + $0x588] sm:$0xff]
    %v209 = vld [vmem:[%s1 + $0x590] sm:$0xff]
    %v210 = vld [vmem:[%s1 + $0x598] sm:$0xff]
    %v211 = vld [vmem:[%s1 + $0x5a0] sm:$0xff]
    %v212 = vld [vmem:[%s1 + $0x5a8] sm:$0xff]
    %v213 = vld [vmem:[%s1 + $0x5b0] sm:$0xff]
    %v214 = vld [vmem:[%s1 + $0x5b8] sm:$0xff]
    %v215 = vld [vmem:[%s1 + $0x5c0] sm:$0xff]
    %v216 = vld [vmem:[%s1 + $0x5c8] sm:$0xff]
    %v217 = vld [vmem:[%s1 + $0x5d0] sm:$0xff]
    %v218 = vld [vmem:[%s1 + $0x5d8] sm:$0xff]
    %v219 = vld [vmem:[%s1 + $0x5e0] sm:$0xff]
    %v220 = vld [vmem:[%s1 + $0x5e8] sm:$0xff]
    %v221 = vld [vmem:[%s1 + $0x5f0] sm:$0xff]
    %v222 = vld [vmem:[%s1 + $0x5f8] sm:$0xff]
    %v223 = vld [vmem:[%s1 + $0x600] sm:$0xff]
    %v224 = vld [vmem:[%s1 + $0x608] sm:$0xff]
    %v225 = vld [vmem:[%s1 + $0x610] sm:$0xff]
    %v226 = vld [vmem:[%s1 + $0x618] sm:$0xff]
    %v227 = vld [vmem:[%s1 + $0x620] sm:$0xff]
    %v228 = vld [vmem:[%s1 + $0x628] sm:$0xff]
    %v229 = vld [vmem:[%s1 + $0x630] sm:$0xff]
    %v230 = vld [vmem:[%s1 + $0x638] sm:$0xff]
    %v231 = vld [vmem:[%s1 + $0x640] sm:$0xff]
    %v232 = vld [vmem:[%s1 + $0x648] sm:$0xff]
    %v233 = vld [vmem:[%s1 + $0x650] sm:$0xff]
    %v234 = vld [vmem:[%s1 + $0x658] sm:$0xff]
    %v235 = vld [vmem:[%s1 + $0x660] sm:$0xff]
    %v236 = vld [vmem:[%s1 + $0x668] sm:$0xff]
    %v237 = vld [vmem:[%s1 + $0x670] sm:$0xff]
    %v238 = vld [vmem:[%s1 + $0x678] sm:$0xff]
    %v239 = vld [vmem:[%s1 + $0x680] sm:$0xff]
    %v240 = vld [vmem:[%s1 + $0x688] sm:$0xff]
    %v241 = vld [vmem:[%s1 + $0x690] sm:$0xff]
    %v242 = vld [vmem:[%s1 + $0x698] sm:$0xff]
    %v243 = vld [vmem:[%s1 + $0x6a0] sm:$0xff]
    %v244 = vld [vmem:[%s1 + $0x6a8] sm:$0xff]
    %v245 = vld [vmem:[%s1 + $0x6b0] sm:$0xff]
    %v246 = vld [vmem:[%s1 + $0x6b8] sm:$0xff]
    %v247 = vld [vmem:[%s1 + $0x6c0] sm:$0xff]
    %v248 = vld [vmem:[%s1 + $0x6c8] sm:$0xff]
    %v249 = vld [vmem:[%s1 + $0x6d0] sm:$0xff]
    %v250 = vld [vmem:[%s1 + $0x6d8] sm:$0xff]
    %v251 = vld [vmem:[%s1 + $0x6e0] sm:$0xff]
    %v252 = vld [vmem:[%s1 + $0x6e8] sm:$0xff]
    %v253 = vld [vmem:[%s1 + $0x6f0] sm:$0xff]
    %v254 = vld [vmem:[%s1 + $0x6f8] sm:$0xff]
    %v255 = vld [vmem:[%s1 + $0x700] sm:$0xff]
    %v256 = vld [vmem:[%s1 + $0x708] sm:$0xff]
    %v257 = vld [vmem:[%s1 + $0x710] sm:$0xff]
    %v258 = vld [vmem:[%s1 + $0x718] sm:$0xff]
    %v259 = vld [vmem:[%s1 + $0x720] sm:$0xff]
    %v260 = vld [vmem:[%s1 + $0x728] sm:$0xff]
    %v261 = vld [vmem:[%s1 + $0x730] sm:$0xff]
    %v262 = vld [vmem:[%s1 + $0x738] sm:$0xff]
    %v263 = vld [vmem:[%s1 + $0x740] sm:$0xff]
    %v264 = vld [vmem:[%s1 + $0x748] sm:$0xff]
    %v265 = vld [vmem:[%s1 + $0x750] sm:$0xff]
    %v266 = vld [vmem:[%s1 + $0x758] sm:$0xff]
    %v267 = vld [vmem:[%s1 + $0x760] sm:$0xff]
    %v268 = vld [vmem:[%s1 + $0x768] sm:$0xff]
    %v269 = vld [vmem:[%s1 + $0x770] sm:$0xff]
    %v270 = vld [vmem:[%s1 + $0x778] sm:$0xff]
    %v271 = vld [vmem:[%s1 + $0x780] sm:$0xff]
    %v272 = vld [vmem:[%s1 + $0x788] sm:$0xff]
    %v273 = vld [vmem:[%s1 + $0x790] sm:$0xff]
    %v274 = vld [vmem:[%s1 + $0x798] sm:$0xff]
    %v275 = vld [vmem:[%s1 + $0x7a0] sm:$0xff]
    %v276 = vld [vmem:[%s1 + $0x7a8] sm:$0xff]
    %v277 = vld [vmem:[%s1 + $0x7b0] sm:$0xff]
    %v278 = vld [vmem:[%s1 + $0x7b8] sm:$0xff]
    %v279 = vld [vmem:[%s1 + $0x7c0] sm:$0xff]
    %v280 = vld [vmem:[%s1 + $0x7c8] sm:$0xff]
    %v281 = vld [vmem:[%s1 + $0x7d0] sm:$0xff]
    %v282 = vld [vmem:[%s1 + $0x7d8] sm:$0xff]
    %v283 = vld [vmem:[%s1 + $0x7e0] sm:$0xff]
    %v284 = vld [vmem:[%s1 + $0x7e8] sm:$0xff]
    %v285 = vld [vmem:[%s1 + $0x7f0] sm:$0xff]
    %v286 = vld [vmem:[%s1 + $0x7f8] sm:$0xff]
    %v287 = vld [vmem:[%s2] sm:$0x1]
    %v289 = vlaneseq
    %v290 = vshrl.u32 %v289, 7
    %v291 = vsub.s32 0, %v290
    %v292 = vrot.slane %v287, %v291
    %294 = vmatprep.subr.mxu0 0.0
    %295 = vmatpush1.msra.mxu0 %v46
    %296 = vmatprep.subr.mxu0 0.0
    %297 = vmatpush1.msra.mxu0 %v45
    %298 = vmatprep.subr.mxu0 0.0
    %299 = vmatpush1.msra.mxu0 %v44
    %300 = vmatprep.subr.mxu0 0.0
    %301 = vmatpush1.msra.mxu0 %v43
    %302 = vmatprep.subr.mxu0 0.0
    %303 = vmatpush1.msra.mxu0 %v42
    %304 = vmatprep.subr.mxu0 0.0
    %305 = vmatpush1.msra.mxu0 %v41
    %306 = vmatprep.subr.mxu0 0.0
    %307 = vmatpush1.msra.mxu0 %v40
    %308 = vmatprep.subr.mxu0 0.0
    %309 = vmatpush1.msra.mxu0 %v39
    %310 = vmatprep.subr.mxu0 0.0
    %311 = vmatpush1.msra.mxu0 %v38
    %312 = vmatprep.subr.mxu0 0.0
    %313 = vmatpush1.msra.mxu0 %v37
    %314 = vmatprep.subr.mxu0 0.0
    %315 = vmatpush1.msra.mxu0 %v36
    %316 = vmatprep.subr.mxu0 0.0
    %317 = vmatpush1.msra.mxu0 %v35
    %318 = vmatprep.subr.mxu0 0.0
    %319 = vmatpush1.msra.mxu0 %v34
    %320 = vmatprep.subr.mxu0 0.0
    %321 = vmatpush1.msra.mxu0 %v33
    %322 = vmatprep.subr.mxu0 0.0
    %323 = vmatpush1.msra.mxu0 %v32
    %324 = vmatprep.subr.mxu0 0.0
    %325 = vmatpush1.msra.mxu0 %v31
    %326 = vmatprep.subr.mxu0 0.0
    %327 = vmatpush2.msra.mxu0 %v62
    %328 = vmatprep.subr.mxu0 0.0
    %329 = vmatpush2.msra.mxu0 %v61
    %330 = vmatprep.subr.mxu0 0.0
    %331 = vmatpush2.msra.mxu0 %v60
    %332 = vmatprep.subr.mxu0 0.0
    %333 = vmatpush2.msra.mxu0 %v59
    %334 = vmatprep.subr.mxu0 0.0
    %335 = vmatpush2.msra.mxu0 %v58
    %336 = vmatprep.subr.mxu0 0.0
    %337 = vmatpush2.msra.mxu0 %v57
    %338 = vmatprep.subr.mxu0 0.0
    %339 = vmatpush2.msra.mxu0 %v56
    %340 = vmatprep.subr.mxu0 0.0
    %341 = vmatpush2.msra.mxu0 %v55
    %342 = vmatprep.subr.mxu0 0.0
    %343 = vmatpush2.msra.mxu0 %v54
    %344 = vmatprep.subr.mxu0 0.0
    %345 = vmatpush2.msra.mxu0 %v53
    %346 = vmatprep.subr.mxu0 0.0
    %347 = vmatpush2.msra.mxu0 %v52
    %348 = vmatprep.subr.mxu0 0.0
    %349 = vmatpush2.msra.mxu0 %v51
    %350 = vmatprep.subr.mxu0 0.0
    %351 = vmatpush2.msra.mxu0 %v50
    %352 = vmatprep.subr.mxu0 0.0
    %353 = vmatpush2.msra.mxu0 %v49
    %354 = vmatprep.subr.mxu0 0.0
    %355 = vmatpush2.msra.mxu0 %v48
    %356 = vmatprep.subr.mxu0 0.0
    %357 = vmatpush2.msra.mxu0 %v47
    %358 = vmatprep.mubr.f32.mxu0 %v16
    %359 = vmatmul.mubr.f32.gmra.mxu0 %v15
    %v360 = vpop.f32.mrf.mxu0
    %v361 = vadd.f32 %v292, %v360
    %v362 = vpop.f32.mrf.mxu0
    %363 = vdwg.mxu0
    %364 = vmatprep.subr.mxu0 0.0
    %365 = vmatpush1.msra.mxu0 %v78
    %366 = vmatprep.subr.mxu0 0.0
    %367 = vmatpush1.msra.mxu0 %v77
    %368 = vmatprep.subr.mxu0 0.0
    %369 = vmatpush1.msra.mxu0 %v76
    %370 = vmatprep.subr.mxu0 0.0
    %371 = vmatpush1.msra.mxu0 %v75
    %372 = vmatprep.subr.mxu0 0.0
    %373 = vmatpush1.msra.mxu0 %v74
    %374 = vmatprep.subr.mxu0 0.0
    %375 = vmatpush1.msra.mxu0 %v73
    %376 = vmatprep.subr.mxu0 0.0
    %377 = vmatpush1.msra.mxu0 %v72
    %378 = vmatprep.subr.mxu0 0.0
    %379 = vmatpush1.msra.mxu0 %v71
    %380 = vmatprep.subr.mxu0 0.0
    %381 = vmatpush1.msra.mxu0 %v70
    %382 = vmatprep.subr.mxu0 0.0
    %383 = vmatpush1.msra.mxu0 %v69
    %384 = vmatprep.subr.mxu0 0.0
    %385 = vmatpush1.msra.mxu0 %v68
    %386 = vmatprep.subr.mxu0 0.0
    %387 = vmatpush1.msra.mxu0 %v67
    %388 = vmatprep.subr.mxu0 0.0
    %389 = vmatpush1.msra.mxu0 %v66
    %390 = vmatprep.subr.mxu0 0.0
    %391 = vmatpush1.msra.mxu0 %v65
    %392 = vmatprep.subr.mxu0 0.0
    %393 = vmatpush1.msra.mxu0 %v64
    %394 = vmatprep.subr.mxu0 0.0
    %395 = vmatpush1.msra.mxu0 %v63
    %396 = vmatprep.subr.mxu0 0.0
    %397 = vmatpush2.msra.mxu0 %v94
    %398 = vmatprep.subr.mxu0 0.0
    %399 = vmatpush2.msra.mxu0 %v93
    %400 = vmatprep.subr.mxu0 0.0
    %401 = vmatpush2.msra.mxu0 %v92
    %402 = vmatprep.subr.mxu0 0.0
    %403 = vmatpush2.msra.mxu0 %v91
    %404 = vmatprep.subr.mxu0 0.0
    %405 = vmatpush2.msra.mxu0 %v90
    %406 = vmatprep.subr.mxu0 0.0
    %407 = vmatpush2.msra.mxu0 %v89
    %408 = vmatprep.subr.mxu0 0.0
    %409 = vmatpush2.msra.mxu0 %v88
    %410 = vmatprep.subr.mxu0 0.0
    %411 = vmatpush2.msra.mxu0 %v87
    %412 = vmatprep.subr.mxu0 0.0
    %413 = vmatpush2.msra.mxu0 %v86
    %414 = vmatprep.subr.mxu0 0.0
    %415 = vmatpush2.msra.mxu0 %v85
    %416 = vmatprep.subr.mxu0 0.0
    %417 = vmatpush2.msra.mxu0 %v84
    %418 = vmatprep.subr.mxu0 0.0
    %419 = vmatpush2.msra.mxu0 %v83
    %420 = vmatprep.subr.mxu0 0.0
    %421 = vmatpush2.msra.mxu0 %v82
    %422 = vmatprep.subr.mxu0 0.0
    %423 = vmatpush2.msra.mxu0 %v81
    %424 = vmatprep.subr.mxu0 0.0
    %425 = vmatpush2.msra.mxu0 %v80
    %426 = vmatprep.subr.mxu0 0.0
    %427 = vmatpush2.msra.mxu0 %v79
    %428 = vmatprep.mubr.f32.mxu0 %v18
    %429 = vmatmul.mubr.f32.gmra.mxu0 %v17
    %v430 = vpop.f32.mrf.mxu0
    %v431 = vadd.f32 %v361, %v430
    %v432 = vpop.f32.mrf.mxu0
    %433 = vdwg.mxu0
    %434 = vmatprep.subr.mxu0 0.0
    %435 = vmatpush1.msra.mxu0 %v110
    %436 = vmatprep.subr.mxu0 0.0
    %437 = vmatpush1.msra.mxu0 %v109
    %438 = vmatprep.subr.mxu0 0.0
    %439 = vmatpush1.msra.mxu0 %v108
    %440 = vmatprep.subr.mxu0 0.0
    %441 = vmatpush1.msra.mxu0 %v107
    %442 = vmatprep.subr.mxu0 0.0
    %443 = vmatpush1.msra.mxu0 %v106
    %444 = vmatprep.subr.mxu0 0.0
    %445 = vmatpush1.msra.mxu0 %v105
    %446 = vmatprep.subr.mxu0 0.0
    %447 = vmatpush1.msra.mxu0 %v104
    %448 = vmatprep.subr.mxu0 0.0
    %449 = vmatpush1.msra.mxu0 %v103
    %450 = vmatprep.subr.mxu0 0.0
    %451 = vmatpush1.msra.mxu0 %v102
    %452 = vmatprep.subr.mxu0 0.0
    %453 = vmatpush1.msra.mxu0 %v101
    %454 = vmatprep.subr.mxu0 0.0
    %455 = vmatpush1.msra.mxu0 %v100
    %456 = vmatprep.subr.mxu0 0.0
    %457 = vmatpush1.msra.mxu0 %v99
    %458 = vmatprep.subr.mxu0 0.0
    %459 = vmatpush1.msra.mxu0 %v98
    %460 = vmatprep.subr.mxu0 0.0
    %461 = vmatpush1.msra.mxu0 %v97
    %462 = vmatprep.subr.mxu0 0.0
    %463 = vmatpush1.msra.mxu0 %v96
    %464 = vmatprep.subr.mxu0 0.0
    %465 = vmatpush1.msra.mxu0 %v95
    %466 = vmatprep.subr.mxu0 0.0
    %467 = vmatpush2.msra.mxu0 %v126
    %468 = vmatprep.subr.mxu0 0.0
    %469 = vmatpush2.msra.mxu0 %v125
    %470 = vmatprep.subr.mxu0 0.0
    %471 = vmatpush2.msra.mxu0 %v124
    %472 = vmatprep.subr.mxu0 0.0
    %473 = vmatpush2.msra.mxu0 %v123
    %474 = vmatprep.subr.mxu0 0.0
    %475 = vmatpush2.msra.mxu0 %v122
    %476 = vmatprep.subr.mxu0 0.0
    %477 = vmatpush2.msra.mxu0 %v121
    %478 = vmatprep.subr.mxu0 0.0
    %479 = vmatpush2.msra.mxu0 %v120
    %480 = vmatprep.subr.mxu0 0.0
    %481 = vmatpush2.msra.mxu0 %v119
    %482 = vmatprep.subr.mxu0 0.0
    %483 = vmatpush2.msra.mxu0 %v118
    %484 = vmatprep.subr.mxu0 0.0
    %485 = vmatpush2.msra.mxu0 %v117
    %486 = vmatprep.subr.mxu0 0.0
    %487 = vmatpush2.msra.mxu0 %v116
    %488 = vmatprep.subr.mxu0 0.0
    %489 = vmatpush2.msra.mxu0 %v115
    %490 = vmatprep.subr.mxu0 0.0
    %491 = vmatpush2.msra.mxu0 %v114
    %492 = vmatprep.subr.mxu0 0.0
    %493 = vmatpush2.msra.mxu0 %v113
    %494 = vmatprep.subr.mxu0 0.0
    %495 = vmatpush2.msra.mxu0 %v112
    %496 = vmatprep.subr.mxu0 0.0
    %497 = vmatpush2.msra.mxu0 %v111
    %498 = vmatprep.mubr.f32.mxu0 %v20
    %499 = vmatmul.mubr.f32.gmra.mxu0 %v19
    %v500 = vpop.f32.mrf.mxu0
    %v501 = vadd.f32 %v431, %v500
    %v502 = vpop.f32.mrf.mxu0
    %503 = vdwg.mxu0
    %504 = vmatprep.subr.mxu0 0.0
    %505 = vmatpush1.msra.mxu0 %v142
    %506 = vmatprep.subr.mxu0 0.0
    %507 = vmatpush1.msra.mxu0 %v141
    %508 = vmatprep.subr.mxu0 0.0
    %509 = vmatpush1.msra.mxu0 %v140
    %510 = vmatprep.subr.mxu0 0.0
    %511 = vmatpush1.msra.mxu0 %v139
    %512 = vmatprep.subr.mxu0 0.0
    %513 = vmatpush1.msra.mxu0 %v138
    %514 = vmatprep.subr.mxu0 0.0
    %515 = vmatpush1.msra.mxu0 %v137
    %516 = vmatprep.subr.mxu0 0.0
    %517 = vmatpush1.msra.mxu0 %v136
    %518 = vmatprep.subr.mxu0 0.0
    %519 = vmatpush1.msra.mxu0 %v135
    %520 = vmatprep.subr.mxu0 0.0
    %521 = vmatpush1.msra.mxu0 %v134
    %522 = vmatprep.subr.mxu0 0.0
    %523 = vmatpush1.msra.mxu0 %v133
    %524 = vmatprep.subr.mxu0 0.0
    %525 = vmatpush1.msra.mxu0 %v132
    %526 = vmatprep.subr.mxu0 0.0
    %527 = vmatpush1.msra.mxu0 %v131
    %528 = vmatprep.subr.mxu0 0.0
    %529 = vmatpush1.msra.mxu0 %v130
    %530 = vmatprep.subr.mxu0 0.0
    %531 = vmatpush1.msra.mxu0 %v129
    %532 = vmatprep.subr.mxu0 0.0
    %533 = vmatpush1.msra.mxu0 %v128
    %534 = vmatprep.subr.mxu0 0.0
    %535 = vmatpush1.msra.mxu0 %v127
    %536 = vmatprep.subr.mxu0 0.0
    %537 = vmatpush2.msra.mxu0 %v158
    %538 = vmatprep.subr.mxu0 0.0
    %539 = vmatpush2.msra.mxu0 %v157
    %540 = vmatprep.subr.mxu0 0.0
    %541 = vmatpush2.msra.mxu0 %v156
    %542 = vmatprep.subr.mxu0 0.0
    %543 = vmatpush2.msra.mxu0 %v155
    %544 = vmatprep.subr.mxu0 0.0
    %545 = vmatpush2.msra.mxu0 %v154
    %546 = vmatprep.subr.mxu0 0.0
    %547 = vmatpush2.msra.mxu0 %v153
    %548 = vmatprep.subr.mxu0 0.0
    %549 = vmatpush2.msra.mxu0 %v152
    %550 = vmatprep.subr.mxu0 0.0
    %551 = vmatpush2.msra.mxu0 %v151
    %552 = vmatprep.subr.mxu0 0.0
    %553 = vmatpush2.msra.mxu0 %v150
    %554 = vmatprep.subr.mxu0 0.0
    %555 = vmatpush2.msra.mxu0 %v149
    %556 = vmatprep.subr.mxu0 0.0
    %557 = vmatpush2.msra.mxu0 %v148
    %558 = vmatprep.subr.mxu0 0.0
    %559 = vmatpush2.msra.mxu0 %v147
    %560 = vmatprep.subr.mxu0 0.0
    %561 = vmatpush2.msra.mxu0 %v146
    %562 = vmatprep.subr.mxu0 0.0
    %563 = vmatpush2.msra.mxu0 %v145
    %564 = vmatprep.subr.mxu0 0.0
    %565 = vmatpush2.msra.mxu0 %v144
    %566 = vmatprep.subr.mxu0 0.0
    %567 = vmatpush2.msra.mxu0 %v143
    %568 = vmatprep.mubr.f32.mxu0 %v22
    %569 = vmatmul.mubr.f32.gmra.mxu0 %v21
    %v570 = vpop.f32.mrf.mxu0
    %v571 = vadd.f32 %v501, %v570
    %v572 = vpop.f32.mrf.mxu0
    %573 = vdwg.mxu0
    %574 = vmatprep.subr.mxu0 0.0
    %575 = vmatpush1.msra.mxu0 %v174
    %576 = vmatprep.subr.mxu0 0.0
    %577 = vmatpush1.msra.mxu0 %v173
    %578 = vmatprep.subr.mxu0 0.0
    %579 = vmatpush1.msra.mxu0 %v172
    %580 = vmatprep.subr.mxu0 0.0
    %581 = vmatpush1.msra.mxu0 %v171
    %582 = vmatprep.subr.mxu0 0.0
    %583 = vmatpush1.msra.mxu0 %v170
    %584 = vmatprep.subr.mxu0 0.0
    %585 = vmatpush1.msra.mxu0 %v169
    %586 = vmatprep.subr.mxu0 0.0
    %587 = vmatpush1.msra.mxu0 %v168
    %588 = vmatprep.subr.mxu0 0.0
    %589 = vmatpush1.msra.mxu0 %v167
    %590 = vmatprep.subr.mxu0 0.0
    %591 = vmatpush1.msra.mxu0 %v166
    %592 = vmatprep.subr.mxu0 0.0
    %593 = vmatpush1.msra.mxu0 %v165
    %594 = vmatprep.subr.mxu0 0.0
    %595 = vmatpush1.msra.mxu0 %v164
    %596 = vmatprep.subr.mxu0 0.0
    %597 = vmatpush1.msra.mxu0 %v163
    %598 = vmatprep.subr.mxu0 0.0
    %599 = vmatpush1.msra.mxu0 %v162
    %600 = vmatprep.subr.mxu0 0.0
    %601 = vmatpush1.msra.mxu0 %v161
    %602 = vmatprep.subr.mxu0 0.0
    %603 = vmatpush1.msra.mxu0 %v160
    %604 = vmatprep.subr.mxu0 0.0
    %605 = vmatpush1.msra.mxu0 %v159
    %606 = vmatprep.subr.mxu0 0.0
    %607 = vmatpush2.msra.mxu0 %v190
    %608 = vmatprep.subr.mxu0 0.0
    %609 = vmatpush2.msra.mxu0 %v189
    %610 = vmatprep.subr.mxu0 0.0
    %611 = vmatpush2.msra.mxu0 %v188
    %612 = vmatprep.subr.mxu0 0.0
    %613 = vmatpush2.msra.mxu0 %v187
    %614 = vmatprep.subr.mxu0 0.0
    %615 = vmatpush2.msra.mxu0 %v186
    %616 = vmatprep.subr.mxu0 0.0
    %617 = vmatpush2.msra.mxu0 %v185
    %618 = vmatprep.subr.mxu0 0.0
    %619 = vmatpush2.msra.mxu0 %v184
    %620 = vmatprep.subr.mxu0 0.0
    %621 = vmatpush2.msra.mxu0 %v183
    %622 = vmatprep.subr.mxu0 0.0
    %623 = vmatpush2.msra.mxu0 %v182
    %624 = vmatprep.subr.mxu0 0.0
    %625 = vmatpush2.msra.mxu0 %v181
    %626 = vmatprep.subr.mxu0 0.0
    %627 = vmatpush2.msra.mxu0 %v180
    %628 = vmatprep.subr.mxu0 0.0
    %629 = vmatpush2.msra.mxu0 %v179
    %630 = vmatprep.subr.mxu0 0.0
    %631 = vmatpush2.msra.mxu0 %v178
    %632 = vmatprep.subr.mxu0 0.0
    %633 = vmatpush2.msra.mxu0 %v177
    %634 = vmatprep.subr.mxu0 0.0
    %635 = vmatpush2.msra.mxu0 %v176
    %636 = vmatprep.subr.mxu0 0.0
    %637 = vmatpush2.msra.mxu0 %v175
    %638 = vmatprep.mubr.f32.mxu0 %v24
    %639 = vmatmul.mubr.f32.gmra.mxu0 %v23
    %v640 = vpop.f32.mrf.mxu0
    %v641 = vadd.f32 %v571, %v640
    %v642 = vpop.f32.mrf.mxu0
    %643 = vdwg.mxu0
    %644 = vmatprep.subr.mxu0 0.0
    %645 = vmatpush1.msra.mxu0 %v206
    %646 = vmatprep.subr.mxu0 0.0
    %647 = vmatpush1.msra.mxu0 %v205
    %648 = vmatprep.subr.mxu0 0.0
    %649 = vmatpush1.msra.mxu0 %v204
    %650 = vmatprep.subr.mxu0 0.0
    %651 = vmatpush1.msra.mxu0 %v203
    %652 = vmatprep.subr.mxu0 0.0
    %653 = vmatpush1.msra.mxu0 %v202
    %654 = vmatprep.subr.mxu0 0.0
    %655 = vmatpush1.msra.mxu0 %v201
    %656 = vmatprep.subr.mxu0 0.0
    %657 = vmatpush1.msra.mxu0 %v200
    %658 = vmatprep.subr.mxu0 0.0
    %659 = vmatpush1.msra.mxu0 %v199
    %660 = vmatprep.subr.mxu0 0.0
    %661 = vmatpush1.msra.mxu0 %v198
    %662 = vmatprep.subr.mxu0 0.0
    %663 = vmatpush1.msra.mxu0 %v197
    %664 = vmatprep.subr.mxu0 0.0
    %665 = vmatpush1.msra.mxu0 %v196
    %666 = vmatprep.subr.mxu0 0.0
    %667 = vmatpush1.msra.mxu0 %v195
    %668 = vmatprep.subr.mxu0 0.0
    %669 = vmatpush1.msra.mxu0 %v194
    %670 = vmatprep.subr.mxu0 0.0
    %671 = vmatpush1.msra.mxu0 %v193
    %672 = vmatprep.subr.mxu0 0.0
    %673 = vmatpush1.msra.mxu0 %v192
    %674 = vmatprep.subr.mxu0 0.0
    %675 = vmatpush1.msra.mxu0 %v191
    %676 = vmatprep.subr.mxu0 0.0
    %677 = vmatpush2.msra.mxu0 %v222
    %678 = vmatprep.subr.mxu0 0.0
    %679 = vmatpush2.msra.mxu0 %v221
    %680 = vmatprep.subr.mxu0 0.0
    %681 = vmatpush2.msra.mxu0 %v220
    %682 = vmatprep.subr.mxu0 0.0
    %683 = vmatpush2.msra.mxu0 %v219
    %684 = vmatprep.subr.mxu0 0.0
    %685 = vmatpush2.msra.mxu0 %v218
    %686 = vmatprep.subr.mxu0 0.0
    %687 = vmatpush2.msra.mxu0 %v217
    %688 = vmatprep.subr.mxu0 0.0
    %689 = vmatpush2.msra.mxu0 %v216
    %690 = vmatprep.subr.mxu0 0.0
    %691 = vmatpush2.msra.mxu0 %v215
    %692 = vmatprep.subr.mxu0 0.0
    %693 = vmatpush2.msra.mxu0 %v214
    %694 = vmatprep.subr.mxu0 0.0
    %695 = vmatpush2.msra.mxu0 %v213
    %696 = vmatprep.subr.mxu0 0.0
    %697 = vmatpush2.msra.mxu0 %v212
    %698 = vmatprep.subr.mxu0 0.0
    %699 = vmatpush2.msra.mxu0 %v211
    %700 = vmatprep.subr.mxu0 0.0
    %701 = vmatpush2.msra.mxu0 %v210
    %702 = vmatprep.subr.mxu0 0.0
    %703 = vmatpush2.msra.mxu0 %v209
    %704 = vmatprep.subr.mxu0 0.0
    %705 = vmatpush2.msra.mxu0 %v208
    %706 = vmatprep.subr.mxu0 0.0
    %707 = vmatpush2.msra.mxu0 %v207
    %708 = vmatprep.mubr.f32.mxu0 %v26
    %709 = vmatmul.mubr.f32.gmra.mxu0 %v25
    %v710 = vpop.f32.mrf.mxu0
    %v711 = vadd.f32 %v641, %v710
    %v712 = vpop.f32.mrf.mxu0
    %713 = vdwg.mxu0
    %714 = vmatprep.subr.mxu0 0.0
    %715 = vmatpush1.msra.mxu0 %v238
    %716 = vmatprep.subr.mxu0 0.0
    %717 = vmatpush1.msra.mxu0 %v237
    %718 = vmatprep.subr.mxu0 0.0
    %719 = vmatpush1.msra.mxu0 %v236
    %720 = vmatprep.subr.mxu0 0.0
    %721 = vmatpush1.msra.mxu0 %v235
    %722 = vmatprep.subr.mxu0 0.0
    %723 = vmatpush1.msra.mxu0 %v234
    %724 = vmatprep.subr.mxu0 0.0
    %725 = vmatpush1.msra.mxu0 %v233
    %726 = vmatprep.subr.mxu0 0.0
    %727 = vmatpush1.msra.mxu0 %v232
    %728 = vmatprep.subr.mxu0 0.0
    %729 = vmatpush1.msra.mxu0 %v231
    %730 = vmatprep.subr.mxu0 0.0
    %731 = vmatpush1.msra.mxu0 %v230
    %732 = vmatprep.subr.mxu0 0.0
    %733 = vmatpush1.msra.mxu0 %v229
    %734 = vmatprep.subr.mxu0 0.0
    %735 = vmatpush1.msra.mxu0 %v228
    %736 = vmatprep.subr.mxu0 0.0
    %737 = vmatpush1.msra.mxu0 %v227
    %738 = vmatprep.subr.mxu0 0.0
    %739 = vmatpush1.msra.mxu0 %v226
    %740 = vmatprep.subr.mxu0 0.0
    %741 = vmatpush1.msra.mxu0 %v225
    %742 = vmatprep.subr.mxu0 0.0
    %743 = vmatpush1.msra.mxu0 %v224
    %744 = vmatprep.subr.mxu0 0.0
    %745 = vmatpush1.msra.mxu0 %v223
    %746 = vmatprep.subr.mxu0 0.0
    %747 = vmatpush2.msra.mxu0 %v254
    %748 = vmatprep.subr.mxu0 0.0
    %749 = vmatpush2.msra.mxu0 %v253
    %750 = vmatprep.subr.mxu0 0.0
    %751 = vmatpush2.msra.mxu0 %v252
    %752 = vmatprep.subr.mxu0 0.0
    %753 = vmatpush2.msra.mxu0 %v251
    %754 = vmatprep.subr.mxu0 0.0
    %755 = vmatpush2.msra.mxu0 %v250
    %756 = vmatprep.subr.mxu0 0.0
    %757 = vmatpush2.msra.mxu0 %v249
    %758 = vmatprep.subr.mxu0 0.0
    %759 = vmatpush2.msra.mxu0 %v248
    %760 = vmatprep.subr.mxu0 0.0
    %761 = vmatpush2.msra.mxu0 %v247
    %762 = vmatprep.subr.mxu0 0.0
    %763 = vmatpush2.msra.mxu0 %v246
    %764 = vmatprep.subr.mxu0 0.0
    %765 = vmatpush2.msra.mxu0 %v245
    %766 = vmatprep.subr.mxu0 0.0
    %767 = vmatpush2.msra.mxu0 %v244
    %768 = vmatprep.subr.mxu0 0.0
    %769 = vmatpush2.msra.mxu0 %v243
    %770 = vmatprep.subr.mxu0 0.0
    %771 = vmatpush2.msra.mxu0 %v242
    %772 = vmatprep.subr.mxu0 0.0
    %773 = vmatpush2.msra.mxu0 %v241
    %774 = vmatprep.subr.mxu0 0.0
    %775 = vmatpush2.msra.mxu0 %v240
    %776 = vmatprep.subr.mxu0 0.0
    %777 = vmatpush2.msra.mxu0 %v239
    %778 = vmatprep.mubr.f32.mxu0 %v28
    %779 = vmatmul.mubr.f32.gmra.mxu0 %v27
    %v780 = vpop.f32.mrf.mxu0
    %v781 = vadd.f32 %v711, %v780
    %v782 = vpop.f32.mrf.mxu0
    %783 = vdwg.mxu0
    %784 = vmatprep.subr.mxu0 0.0
    %785 = vmatpush1.msra.mxu0 %v270
    %786 = vmatprep.subr.mxu0 0.0
    %787 = vmatpush1.msra.mxu0 %v269
    %788 = vmatprep.subr.mxu0 0.0
    %789 = vmatpush1.msra.mxu0 %v268
    %790 = vmatprep.subr.mxu0 0.0
    %791 = vmatpush1.msra.mxu0 %v267
    %792 = vmatprep.subr.mxu0 0.0
    %793 = vmatpush1.msra.mxu0 %v266
    %794 = vmatprep.subr.mxu0 0.0
    %795 = vmatpush1.msra.mxu0 %v265
    %796 = vmatprep.subr.mxu0 0.0
    %797 = vmatpush1.msra.mxu0 %v264
    %798 = vmatprep.subr.mxu0 0.0
    %799 = vmatpush1.msra.mxu0 %v263
    %800 = vmatprep.subr.mxu0 0.0
    %801 = vmatpush1.msra.mxu0 %v262
    %802 = vmatprep.subr.mxu0 0.0
    %803 = vmatpush1.msra.mxu0 %v261
    %804 = vmatprep.subr.mxu0 0.0
    %805 = vmatpush1.msra.mxu0 %v260
    %806 = vmatprep.subr.mxu0 0.0
    %807 = vmatpush1.msra.mxu0 %v259
    %808 = vmatprep.subr.mxu0 0.0
    %809 = vmatpush1.msra.mxu0 %v258
    %810 = vmatprep.subr.mxu0 0.0
    %811 = vmatpush1.msra.mxu0 %v257
    %812 = vmatprep.subr.mxu0 0.0
    %813 = vmatpush1.msra.mxu0 %v256
    %814 = vmatprep.subr.mxu0 0.0
    %815 = vmatpush1.msra.mxu0 %v255
    %816 = vmatprep.subr.mxu0 0.0
    %817 = vmatpush2.msra.mxu0 %v286
    %818 = vmatprep.subr.mxu0 0.0
    %819 = vmatpush2.msra.mxu0 %v285
    %820 = vmatprep.subr.mxu0 0.0
    %821 = vmatpush2.msra.mxu0 %v284
    %822 = vmatprep.subr.mxu0 0.0
    %823 = vmatpush2.msra.mxu0 %v283
    %824 = vmatprep.subr.mxu0 0.0
    %825 = vmatpush2.msra.mxu0 %v282
    %826 = vmatprep.subr.mxu0 0.0
    %827 = vmatpush2.msra.mxu0 %v281
    %828 = vmatprep.subr.mxu0 0.0
    %829 = vmatpush2.msra.mxu0 %v280
    %830 = vmatprep.subr.mxu0 0.0
    %831 = vmatpush2.msra.mxu0 %v279
    %832 = vmatprep.subr.mxu0 0.0
    %833 = vmatpush2.msra.mxu0 %v278
    %834 = vmatprep.subr.mxu0 0.0
    %835 = vmatpush2.msra.mxu0 %v277
    %836 = vmatprep.subr.mxu0 0.0
    %837 = vmatpush2.msra.mxu0 %v276
    %838 = vmatprep.subr.mxu0 0.0
    %839 = vmatpush2.msra.mxu0 %v275
    %840 = vmatprep.subr.mxu0 0.0
    %841 = vmatpush2.msra.mxu0 %v274
    %842 = vmatprep.subr.mxu0 0.0
    %843 = vmatpush2.msra.mxu0 %v273
    %844 = vmatprep.subr.mxu0 0.0
    %845 = vmatpush2.msra.mxu0 %v272
    %846 = vmatprep.subr.mxu0 0.0
    %847 = vmatpush2.msra.mxu0 %v271
    %848 = vmatprep.mubr.f32.mxu0 %v30
    %849 = vmatmul.mubr.f32.gmra.mxu0 %v29
    %v850 = vpop.f32.mrf.mxu0
    %v851 = vadd.f32 %v781, %v850
    %v852 = vpop.f32.mrf.mxu0
    %853 = vdwg.mxu0
    %vm854 = vcmask 162816
    %855 = vst.msk [vmem:[#allocation2] sm:$0xff] %vm854, %v851
    // Predicated region
    $region14: #{tpu_custom_call.1} parent=1 // pred_check
      _
    $region15: #{tpu_custom_call.1} parent=1 // pred_check_branch
      %857 = sbr.rel (0) target = $region17
    $region16: #{tpu_custom_call.1} parent=1 // pred_region
      %s859 = ssub.s32 128, 128
      %860 = vsyncadd [#allocation3], %s859
      %s862 = sshll.u32 [#allocation2], 4
      %s863 = int_to_ptr.vmem [resolvable:$true] %s862
      %865 = dma.vmem_to_hbm [thread:$0]  %s863, 128, %s3, [#allocation3]
    $region17: #{tpu_custom_call.1} parent=1 // pred_fallthru
      _
    // Predicated region
    $region18: #{tpu_custom_call.1} parent=1 // pred_check
      _
    $region19: #{tpu_custom_call.1} parent=1 // pred_check_branch
      %867 = sbr.rel (0) target = $region21
    $region20: #{tpu_custom_call.1} parent=1 // pred_region
      %868 = dma.done [#allocation3], 128
    $region21: #{tpu_custom_call.1} parent=1 // pred_fallthru
      _
    %869 = vsyncpa [#allocation3], 1

</llo_original>
